<compile_context>
chip_gen: v6e
topology: v6e:2x2x1
jax: 0.10.0
libtpu: 0.0.40
codegen_flags: <defaults>
</compile_context>

<pallas_src>
import jax
import jax.numpy as jnp
from jax.experimental import pallas as pl
from jax.experimental.pallas import tpu as pltpu

IN_F, HID, OUT_F = 6, 16, 3


def _round_up(n, m):
    return ((n + m - 1) // m) * m


def _mlp_kernel(x_ref, w1_ref, b1_ref, w2_ref, b2_ref, o_ref):
    # x_ref : (IN, TB)    w1_ref: (HID, IN)   b1_ref: (HID, 1)
    # w2_ref: (OUT, HID)  b2_ref: (OUT, 1)    o_ref : (OUT, TB)
    x = x_ref[...]
    h = jnp.dot(w1_ref[...], x, preferred_element_type=jnp.float32)   # (HID, TB)
    h = jnp.maximum(h + b1_ref[...], 0.0)                             # bias + ReLU
    y = jnp.dot(w2_ref[...], h, preferred_element_type=jnp.float32)   # (OUT, TB)
    o_ref[...] = (y + b2_ref[...]).astype(o_ref.dtype)


def _pick_tb(batch, block_b, min_grid_steps=4):
    """Batch tile on the lane axis.

    Big enough that per-grid-step overhead is amortised against DMA time, but
    capped so the grid keeps >= min_grid_steps steps (v7x megacore needs >=2
    steps on the 'parallel' axis to use both TensorCores).  Always a multiple
    of 128 (vreg lane width)."""
    tb = _round_up(pl.cdiv(batch, min_grid_steps), 128)
    return max(128, min(block_b, tb))


def net_forward_fb(xt, w1, b1, w2, b2, *, block_b=32768):
    """Feature-major forward: xt is (6, B) -> returns (3, B).

    Zero transposes / zero padding copies.  Prefer this entry point when the
    producer / consumer can keep activations in (features, batch) layout."""
    in_f, B = xt.shape
    hid = w1.shape[0]
    out_f = w2.shape[0]

    TB = _pick_tb(B, block_b)
    grid = (pl.cdiv(B, TB),)        # ragged last block handled by write-masking

    b1c = b1.reshape(hid, 1)
    b2c = b2.reshape(out_f, 1)

    cost = pl.CostEstimate(
        flops=2 * B * (in_f * hid + hid * out_f),
        transcendentals=0,
        bytes_accessed=B * (in_f + out_f) * 4
        + (in_f * hid + hid + hid * out_f + out_f) * 4,
    )

    return pl.pallas_call(
        _mlp_kernel,
        out_shape=jax.ShapeDtypeStruct((out_f, B), xt.dtype),
        grid=grid,
        in_specs=[
            # If exposed DMA latency ever shows at small B, deepen to
            # pipeline_mode=pl.Buffered(3) on this spec.
            pl.BlockSpec((in_f, TB), lambda i: (0, i)),      # x tile, batch on lanes
            pl.BlockSpec((hid, in_f), lambda i: (0, 0)),     # W1, VMEM-resident
            pl.BlockSpec((hid, 1), lambda i: (0, 0)),        # b1
            pl.BlockSpec((out_f, hid), lambda i: (0, 0)),    # W2
            pl.BlockSpec((out_f, 1), lambda i: (0, 0)),      # b2
        ],
        out_specs=pl.BlockSpec((out_f, TB), lambda i: (0, i)),  # lane-dense store
        compiler_params=pltpu.CompilerParams(
            dimension_semantics=("parallel",)),              # megacore on v7x
        cost_estimate=cost,
    )(xt, w1, b1c, w2, b2c)


def net_forward(x, w1, b1, w2, b2, *, block_b=32768):
    """PyTorch-convention forward: x (B, 6) -> (B, 3).

    Compatibility wrapper; pays two thin transposes around the feature-major
    kernel.  Use net_forward_fb to avoid them entirely."""
    yt = net_forward_fb(x.T, w1, b1, w2, b2, block_b=block_b)
    return yt.T


def init_params(key):
    """Deterministic init mimicking PyTorch's default Linear init
    (uniform(-1/sqrt(fan_in), +1/sqrt(fan_in))), stored in PyTorch layout."""
    k1, k2, k3, k4 = jax.random.split(key, 4)
    bound1 = 1.0 / jnp.sqrt(6.0)
    bound2 = 1.0 / jnp.sqrt(16.0)
    w1 = jax.random.uniform(k1, (HID, IN_F), jnp.float32, -bound1, bound1)
    b1 = jax.random.uniform(k2, (HID,), jnp.float32, -bound1, bound1)
    w2 = jax.random.uniform(k3, (OUT_F, HID), jnp.float32, -bound2, bound2)
    b2 = jax.random.uniform(k4, (OUT_F,), jnp.float32, -bound2, bound2)
    return w1, b1, w2, b2


def _reference(x, w1, b1, w2, b2):
    return jnp.maximum(x @ w1.T + b1, 0.0) @ w2.T + b2


if __name__ == "__main__":
    key = jax.random.PRNGKey(0)
    kx, kp = jax.random.split(key)
    w1, b1, w2, b2 = init_params(kp)

    # Small batch, single grid step, block larger than the (ragged) batch.
    batch = 8
    x = jax.random.normal(kx, (batch, IN_F), jnp.float32)
    out = jax.block_until_ready(net_forward(x, w1, b1, w2, b2))
    ref = _reference(x, w1, b1, w2, b2)
    assert out.shape == (batch, OUT_F)
    assert jnp.allclose(out, ref, atol=1e-5, rtol=1e-5)

    # Multi-tile check: non-divisible batch (300 = 2*128 + 44) with a small
    # block exercises the cdiv grid, ragged-last-block masking and the
    # parallel-axis path, plus the zero-transpose feature-major entry point.
    batch2 = 300
    x2 = jax.random.normal(jax.random.fold_in(kx, 1), (batch2, IN_F), jnp.float32)
    out2_fb = jax.block_until_ready(
        net_forward_fb(x2.T, w1, b1, w2, b2, block_b=128))
    ref2 = _reference(x2, w1, b1, w2, b2)
    assert out2_fb.shape == (OUT_F, batch2)
    assert jnp.allclose(out2_fb.T, ref2, atol=1e-5, rtol=1e-5)

    # PyTorch-convention wrapper on the same data, default (large) tile.
    out2 = jax.block_until_ready(net_forward(x2, w1, b1, w2, b2))
    assert out2.shape == (batch2, OUT_F)
    assert jnp.allclose(out2, ref2, atol=1e-5, rtol=1e-5)

    print("KERNEL_OK")
</pallas_src>

<mosaic_0001>
module attributes {stable_mosaic.version = 11 : i64} {
  func.func @_mlp_kernel(%arg0: i32, %arg1: memref<6x128xf32, #tpu.memory_space<vmem>>, %arg2: memref<16x6xf32, #tpu.memory_space<vmem>>, %arg3: memref<16x1xf32, #tpu.memory_space<vmem>>, %arg4: memref<3x16xf32, #tpu.memory_space<vmem>>, %arg5: memref<3x1xf32, #tpu.memory_space<vmem>>, %arg6: memref<3x128xf32, #tpu.memory_space<vmem>>) attributes {dimension_semantics = [#tpu.dimension_semantics<parallel>], iteration_bounds = array<i64: 1>, scalar_prefetch = 0 : i64, scratch_operands = 0 : i64, tpu.core_type = #tpu.core_type<tc>, window_params = [{transform_indices = @transform_0, window_bounds = array<i64: 6, 128>}, {pipeline_mode = #tpu.pipeline_mode<synchronous>, transform_indices = @transform_1, window_bounds = array<i64: 16, 6>}, {pipeline_mode = #tpu.pipeline_mode<synchronous>, transform_indices = @transform_2, window_bounds = array<i64: 16, 1>}, {pipeline_mode = #tpu.pipeline_mode<synchronous>, transform_indices = @transform_3, window_bounds = array<i64: 3, 16>}, {pipeline_mode = #tpu.pipeline_mode<synchronous>, transform_indices = @transform_4, window_bounds = array<i64: 3, 1>}, {transform_indices = @transform_5, window_bounds = array<i64: 3, 128>}]} {
    %c0 = arith.constant 0 : index
    %c0_0 = arith.constant 0 : index
    %0 = vector.load %arg1[%c0, %c0_0] : memref<6x128xf32, #tpu.memory_space<vmem>>, vector<6x128xf32>
    %c0_1 = arith.constant 0 : index
    %c0_2 = arith.constant 0 : index
    %1 = vector.load %arg2[%c0_1, %c0_2] : memref<16x6xf32, #tpu.memory_space<vmem>>, vector<16x6xf32>
    %cst = arith.constant dense<0.000000e+00> : vector<16x128xf32>
    %2 = tpu.matmul %1, %0, %cst {dimension_numbers = #tpu.dot_dimension_numbers<[1], [0], [0], [1], [0, 0, 1, 1], [], []>} : vector<16x6xf32>, vector<6x128xf32>, vector<16x128xf32> -> vector<16x128xf32>
    %c0_3 = arith.constant 0 : index
    %c0_4 = arith.constant 0 : index
    %3 = vector.load %arg3[%c0_3, %c0_4] : memref<16x1xf32, #tpu.memory_space<vmem>>, vector<16x1xf32>
    %4 = vector.broadcast %3 : vector<16x1xf32> to vector<16x128xf32>
    %5 = arith.addf %2, %4 : vector<16x128xf32>
    %cst_5 = arith.constant 0.000000e+00 : f32
    %6 = vector.broadcast %cst_5 : f32 to vector<16x128xf32>
    %7 = arith.maximumf %5, %6 : vector<16x128xf32>
    %c0_6 = arith.constant 0 : index
    %c0_7 = arith.constant 0 : index
    %8 = vector.load %arg4[%c0_6, %c0_7] : memref<3x16xf32, #tpu.memory_space<vmem>>, vector<3x16xf32>
    %cst_8 = arith.constant dense<0.000000e+00> : vector<3x128xf32>
    %9 = tpu.matmul %8, %7, %cst_8 {dimension_numbers = #tpu.dot_dimension_numbers<[1], [0], [0], [1], [0, 0, 1, 1], [], []>} : vector<3x16xf32>, vector<16x128xf32>, vector<3x128xf32> -> vector<3x128xf32>
    %c0_9 = arith.constant 0 : index
    %c0_10 = arith.constant 0 : index
    %10 = vector.load %arg5[%c0_9, %c0_10] : memref<3x1xf32, #tpu.memory_space<vmem>>, vector<3x1xf32>
    %11 = vector.broadcast %10 : vector<3x1xf32> to vector<3x128xf32>
    %12 = arith.addf %9, %11 : vector<3x128xf32>
    %c0_11 = arith.constant 0 : index
    %c0_12 = arith.constant 0 : index
    %13 = vector.load %arg6[%c0_11, %c0_12] : memref<3x128xf32, #tpu.memory_space<vmem>>, vector<3x128xf32>
    tpu.vector_store %arg6[%c0_11, %c0_12], %12 {strides = array<i32>} : memref<3x128xf32, #tpu.memory_space<vmem>>, vector<3x128xf32>,
    return
  }
  func.func @transform_0(%arg0: i32) -> (i32, i32) {
    %c0_i32 = arith.constant 0 : i32
    %c0_i32_0 = arith.constant 0 : i32
    return %c0_i32, %arg0 : i32, i32
  }
  func.func @transform_1(%arg0: i32) -> (i32, i32) {
    %c0_i32 = arith.constant 0 : i32
    %c0_i32_0 = arith.constant 0 : i32
    %c0_i32_1 = arith.constant 0 : i32
    return %c0_i32, %c0_i32_0 : i32, i32
  }
  func.func @transform_2(%arg0: i32) -> (i32, i32) {
    %c0_i32 = arith.constant 0 : i32
    %c0_i32_0 = arith.constant 0 : i32
    %c0_i32_1 = arith.constant 0 : i32
    return %c0_i32, %c0_i32_0 : i32, i32
  }
  func.func @transform_3(%arg0: i32) -> (i32, i32) {
    %c0_i32 = arith.constant 0 : i32
    %c0_i32_0 = arith.constant 0 : i32
    %c0_i32_1 = arith.constant 0 : i32
    return %c0_i32, %c0_i32_0 : i32, i32
  }
  func.func @transform_4(%arg0: i32) -> (i32, i32) {
    %c0_i32 = arith.constant 0 : i32
    %c0_i32_0 = arith.constant 0 : i32
    %c0_i32_1 = arith.constant 0 : i32
    return %c0_i32, %c0_i32_0 : i32, i32
  }
  func.func @transform_5(%arg0: i32) -> (i32, i32) {
    %c0_i32 = arith.constant 0 : i32
    %c0_i32_0 = arith.constant 0 : i32
    return %c0_i32, %arg0 : i32, i32
  }
}

</mosaic_0001>

<llo_original>
// kernel: tpu_custom_call.1
$region0: #{tpu_custom_call.1}
  #allocation0 [shape = 'u32[]', space=smem, size = 0x4, offset = 0x4, fixed_abs, tag = 'smem constant byte address 0x4 - core index']
  #allocation1 [shape = 'u32[144,128]{1,0:T(1,128)}', space=vmem, size = 0x12000, scoped, tag = 'internal scratch']
  %s0 = inlined_call_operand.vmem [shape: f32[6,8], index: 0, kind: input, shape index: {}]
  %s1 = inlined_call_operand.vmem [shape: f32[16,6], index: 1, kind: input, shape index: {}]
  %s2 = inlined_call_operand.vmem [shape: f32[16,1], index: 2, kind: input, shape index: {}]
  %s3 = inlined_call_operand.vmem [shape: f32[3,16], index: 3, kind: input, shape index: {}]
  %s4 = inlined_call_operand.vmem [shape: f32[3,1], index: 4, kind: input, shape index: {}]
  %s5 = inlined_call_operand.hbm [shape: f32[3,8], index: 5, kind: output, shape index: {}]
  %s6 = sld [smem:[#allocation0]]
  $region30: #{tpu_custom_call.1} parent=0
    _
  %s8 = ssub.s32 1, %s6
  %s9 = scalar_select 0, %s8, %s6
  $region1: #{tpu_custom_call.1} parent=0
    #allocation2 [shape = 'u8[2048]{0}', space=vmem, size = 0x800, scoped, tag = 'output window, operand 0, single buffered']
    #allocation3 [shape = 's32[1]{0}', space=sflag, size = 0x4, scoped, tag = 'scoped memory for tpu_custom_call.1']
    %10 = vsyncpa [#allocation3], 0
    // Predicated region
    $region2: #{tpu_custom_call.1} parent=1 // pred_check
      _
    $region3: #{tpu_custom_call.1} parent=1 // pred_check_branch
      %12 = sbr.rel (0) target = $region5
    $region4: #{tpu_custom_call.1} parent=1 // pred_region
      _
    $region5: #{tpu_custom_call.1} parent=1 // pred_fallthru
      _
    // Predicated region
    $region6: #{tpu_custom_call.1} parent=1 // pred_check
      _
    $region7: #{tpu_custom_call.1} parent=1 // pred_check_branch
      %14 = sbr.rel (0) target = $region9
    $region8: #{tpu_custom_call.1} parent=1 // pred_region
      _
    $region9: #{tpu_custom_call.1} parent=1 // pred_fallthru
      _
    // Predicated region
    $region10: #{tpu_custom_call.1} parent=1 // pred_check
      _
    $region11: #{tpu_custom_call.1} parent=1 // pred_check_branch
      %16 = sbr.rel (0) target = $region13
    $region12: #{tpu_custom_call.1} parent=1 // pred_region
      _
    $region13: #{tpu_custom_call.1} parent=1 // pred_fallthru
      _
    // Predicated region
    $region14: #{tpu_custom_call.1} parent=1 // pred_check
      _
    $region15: #{tpu_custom_call.1} parent=1 // pred_check_branch
      %18 = sbr.rel (0) target = $region17
    $region16: #{tpu_custom_call.1} parent=1 // pred_region
      _
    $region17: #{tpu_custom_call.1} parent=1 // pred_fallthru
      _
    // Predicated region
    $region18: #{tpu_custom_call.1} parent=1 // pred_check
      _
    $region19: #{tpu_custom_call.1} parent=1 // pred_check_branch
      %20 = sbr.rel (0) target = $region21
    $region20: #{tpu_custom_call.1} parent=1 // pred_region
      _
    $region21: #{tpu_custom_call.1} parent=1 // pred_fallthru
      _
    %v21 = vld [vmem:[%s0] sm:$0x3f]
    %v22 = vld [vmem:[%s1] sm:$0xff]
    %v23 = vld [vmem:[%s1 + $0x8] sm:$0xff]
    %v24 = vld [vmem:[%s2] sm:$0xff]
    %v25 = vld [vmem:[%s2 + $0x8] sm:$0xff]
    %27 = vset.pattern.permute.xlu0 0
    %28 = vperm.xlu0 %27, %v24
    %v29 = vpop.permute.xlu0 %28
    %32 = vset.pattern.permute.xlu0 0
    %33 = vperm.xlu0 %32, %v25
    %v34 = vpop.permute.xlu0 %33
    %vm36 = vcmask 48128
    %v38 = vsel %vm36, %v22, 0
    %v41 = vsel %vm36, %v23, 0
    %vm43 = vcmask 1045504
    %v45 = vsel %vm43, %v21, 0
    %47 = vmatprep.subr.mxu0 0.0
    %48 = vmatpush1.msra.mxu0 0.0
    %49 = vmatprep.subr.mxu0 0.0
    %50 = vmatpush1.msra.mxu0 0.0
    %51 = vmatprep.subr.mxu0 0.0
    %52 = vmatpush1.msra.mxu0 0.0
    %53 = vmatprep.subr.mxu0 0.0
    %54 = vmatpush1.msra.mxu0 0.0
    %55 = vmatprep.subr.mxu0 0.0
    %56 = vmatpush1.msra.mxu0 0.0
    %57 = vmatprep.subr.mxu0 0.0
    %58 = vmatpush1.msra.mxu0 0.0
    %59 = vmatprep.subr.mxu0 0.0
    %60 = vmatpush1.msra.mxu0 0.0
    %61 = vmatprep.subr.mxu0 0.0
    %62 = vmatpush1.msra.mxu0 0.0
    %63 = vmatprep.subr.mxu0 0.0
    %64 = vmatpush1.msra.mxu0 0.0
    %65 = vmatprep.subr.mxu0 0.0
    %66 = vmatpush1.msra.mxu0 0.0
    %67 = vmatprep.subr.mxu0 0.0
    %68 = vmatpush1.msra.mxu0 0.0
    %69 = vmatprep.subr.mxu0 0.0
    %70 = vmatpush1.msra.mxu0 0.0
    %71 = vmatprep.subr.mxu0 0.0
    %72 = vmatpush1.msra.mxu0 0.0
    %73 = vmatprep.subr.mxu0 0.0
    %74 = vmatpush1.msra.mxu0 0.0
    %75 = vmatprep.subr.mxu0 0.0
    %76 = vmatpush1.msra.mxu0 0.0
    %77 = vmatprep.subr.mxu0 0.0
    %78 = vmatpush1.msra.mxu0 %v45
    %79 = vmatprep.subr.mxu0 0.0
    %80 = vmatpush2.msra.mxu0 0.0
    %81 = vmatprep.subr.mxu0 0.0
    %82 = vmatpush2.msra.mxu0 0.0
    %83 = vmatprep.subr.mxu0 0.0
    %84 = vmatpush2.msra.mxu0 0.0
    %85 = vmatprep.subr.mxu0 0.0
    %86 = vmatpush2.msra.mxu0 0.0
    %87 = vmatprep.subr.mxu0 0.0
    %88 = vmatpush2.msra.mxu0 0.0
    %89 = vmatprep.subr.mxu0 0.0
    %90 = vmatpush2.msra.mxu0 0.0
    %91 = vmatprep.subr.mxu0 0.0
    %92 = vmatpush2.msra.mxu0 0.0
    %93 = vmatprep.subr.mxu0 0.0
    %94 = vmatpush2.msra.mxu0 0.0
    %95 = vmatprep.subr.mxu0 0.0
    %96 = vmatpush2.msra.mxu0 0.0
    %97 = vmatprep.subr.mxu0 0.0
    %98 = vmatpush2.msra.mxu0 0.0
    %99 = vmatprep.subr.mxu0 0.0
    %100 = vmatpush2.msra.mxu0 0.0
    %101 = vmatprep.subr.mxu0 0.0
    %102 = vmatpush2.msra.mxu0 0.0
    %103 = vmatprep.subr.mxu0 0.0
    %104 = vmatpush2.msra.mxu0 0.0
    %105 = vmatprep.subr.mxu0 0.0
    %106 = vmatpush2.msra.mxu0 0.0
    %107 = vmatprep.subr.mxu0 0.0
    %108 = vmatpush2.msra.mxu0 0.0
    %109 = vmatprep.subr.mxu0 0.0
    %110 = vmatpush2.msra.mxu0 0.0
    %111 = vmatprep.mubr.f32.mxu0 0.0
    %112 = vmatmul.mubr.f32.gmra.mxu0 %v38
    %v113 = vpop.f32.mrf.mxu0
    %v114 = vadd.f32 %v29, %v113
    %v115 = vpop.f32.mrf.mxu0
    %116 = vmatprep.mubr.f32.mxu0 0.0
    %117 = vmatmul.mubr.f32.gmra.mxu0 %v41
    %v118 = vpop.f32.mrf.mxu0
    %v119 = vadd.f32 %v34, %v118
    %v120 = vpop.f32.mrf.mxu0
    %121 = vdwg.mxu0
    %v122 = vmax.f32 %v114, 0.0
    %v123 = vmax.f32 %v119, 0.0
    %v124 = vld [vmem:[%s3] sm:$0x7]
    %v125 = vld [vmem:[%s4] sm:$0x7]
    %127 = vset.pattern.permute.xlu0 0
    %128 = vperm.xlu0 %127, %v125
    %v129 = vpop.permute.xlu0 %128
    %vm131 = vcmask 130048
    %v133 = vsel %vm131, %v124, 0
    %135 = vmatprep.subr.mxu0 0.0
    %136 = vmatpush1.msra.mxu0 0.0
    %137 = vmatprep.subr.mxu0 0.0
    %138 = vmatpush1.msra.mxu0 0.0
    %139 = vmatprep.subr.mxu0 0.0
    %140 = vmatpush1.msra.mxu0 0.0
    %141 = vmatprep.subr.mxu0 0.0
    %142 = vmatpush1.msra.mxu0 0.0
    %143 = vmatprep.subr.mxu0 0.0
    %144 = vmatpush1.msra.mxu0 0.0
    %145 = vmatprep.subr.mxu0 0.0
    %146 = vmatpush1.msra.mxu0 0.0
    %147 = vmatprep.subr.mxu0 0.0
    %148 = vmatpush1.msra.mxu0 0.0
    %149 = vmatprep.subr.mxu0 0.0
    %150 = vmatpush1.msra.mxu0 0.0
    %151 = vmatprep.subr.mxu0 0.0
    %152 = vmatpush1.msra.mxu0 0.0
    %153 = vmatprep.subr.mxu0 0.0
    %154 = vmatpush1.msra.mxu0 0.0
    %155 = vmatprep.subr.mxu0 0.0
    %156 = vmatpush1.msra.mxu0 0.0
    %157 = vmatprep.subr.mxu0 0.0
    %158 = vmatpush1.msra.mxu0 0.0
    %159 = vmatprep.subr.mxu0 0.0
    %160 = vmatpush1.msra.mxu0 0.0
    %161 = vmatprep.subr.mxu0 0.0
    %162 = vmatpush1.msra.mxu0 0.0
    %163 = vmatprep.subr.mxu0 0.0
    %164 = vmatpush1.msra.mxu0 %v123
    %165 = vmatprep.subr.mxu0 0.0
    %166 = vmatpush1.msra.mxu0 %v122
    %167 = vmatprep.subr.mxu0 0.0
    %168 = vmatpush2.msra.mxu0 0.0
    %169 = vmatprep.subr.mxu0 0.0
    %170 = vmatpush2.msra.mxu0 0.0
    %171 = vmatprep.subr.mxu0 0.0
    %172 = vmatpush2.msra.mxu0 0.0
    %173 = vmatprep.subr.mxu0 0.0
    %174 = vmatpush2.msra.mxu0 0.0
    %175 = vmatprep.subr.mxu0 0.0
    %176 = vmatpush2.msra.mxu0 0.0
    %177 = vmatprep.subr.mxu0 0.0
    %178 = vmatpush2.msra.mxu0 0.0
    %179 = vmatprep.subr.mxu0 0.0
    %180 = vmatpush2.msra.mxu0 0.0
    %181 = vmatprep.subr.mxu0 0.0
    %182 = vmatpush2.msra.mxu0 0.0
    %183 = vmatprep.subr.mxu0 0.0
    %184 = vmatpush2.msra.mxu0 0.0
    %185 = vmatprep.subr.mxu0 0.0
    %186 = vmatpush2.msra.mxu0 0.0
    %187 = vmatprep.subr.mxu0 0.0
    %188 = vmatpush2.msra.mxu0 0.0
    %189 = vmatprep.subr.mxu0 0.0
    %190 = vmatpush2.msra.mxu0 0.0
    %191 = vmatprep.subr.mxu0 0.0
    %192 = vmatpush2.msra.mxu0 0.0
    %193 = vmatprep.subr.mxu0 0.0
    %194 = vmatpush2.msra.mxu0 0.0
    %195 = vmatprep.subr.mxu0 0.0
    %196 = vmatpush2.msra.mxu0 0.0
    %197 = vmatprep.subr.mxu0 0.0
    %198 = vmatpush2.msra.mxu0 0.0
    %199 = vmatprep.mubr.f32.mxu0 0.0
    %200 = vmatmul.mubr.f32.gmra.mxu0 %v133
    %v201 = vpop.f32.mrf.mxu0
    %v202 = vadd.f32 %v129, %v201
    %v203 = vpop.f32.mrf.mxu0
    %204 = vdwg.mxu0
    %205 = vst [vmem:[#allocation2] sm:$0x7] %v202
    // Predicated region
    $region22: #{tpu_custom_call.1} parent=1 // pred_check
      _
    $region23: #{tpu_custom_call.1} parent=1 // pred_check_branch
      %207 = sbr.rel (0) target = $region25
    $region24: #{tpu_custom_call.1} parent=1 // pred_region
      %s209 = ssub.s32 64, 64
      %210 = vsyncadd [#allocation3], %s209
      %s212 = sshll.u32 [#allocation2], 4
      %s213 = int_to_ptr.vmem [resolvable:$true] %s212
      %215 = dma.vmem_to_hbm [thread:$0]  %s213, 64, %s5, [#allocation3]
    $region25: #{tpu_custom_call.1} parent=1 // pred_fallthru
      _
    // Predicated region
    $region26: #{tpu_custom_call.1} parent=1 // pred_check
      _
    $region27: #{tpu_custom_call.1} parent=1 // pred_check_branch
      %217 = sbr.rel (0) target = $region29
    $region28: #{tpu_custom_call.1} parent=1 // pred_region
      %218 = dma.done [#allocation3], 64
    $region29: #{tpu_custom_call.1} parent=1 // pred_fallthru
      _
    %219 = vsyncpa [#allocation3], 1

</llo_original>
